<compile_context>
chip_gen: v7x
topology: tpu7x:2x2x1
jax: 0.10.0
libtpu: 0.0.40
codegen_flags: <defaults>
</compile_context>

<pallas_src>
import functools

import jax
import jax.numpy as jnp
from jax import lax
from jax.experimental import pallas as pl
from jax.experimental.pallas import tpu as pltpu


def _rmsnorm_kernel(x_ref, g_ref, o_ref, *, inv_scale, inv_eps):
    # Hot path: sum-of-squares reduction over lanes + elementwise scale.
    x = x_ref[...].astype(jnp.float32)                    # (tile, D)
    g = g_ref[...]                                        # (1, D), already f32
    ss = jnp.sum(x * x, axis=-1, keepdims=True)           # (tile, 1)
    # x / max(sqrt(ss)*scale, eps)  ==  x * min(rsqrt(ss)/scale, 1/eps)
    # rsqrt runs on the EUP (its own VLIW slot); no f32 divide on the VPU.
    # Zero rows: rsqrt(0)=+inf is tamed by the min (valid for eps > 0).
    inv_norm = jnp.minimum(lax.rsqrt(ss) * inv_scale, inv_eps)
    o_ref[...] = (x * inv_norm * g).astype(o_ref.dtype)


def _sublane_pack(dtype):
    # 8 rows/vreg for 32-bit, 16 for bf16, 32 for int8.
    return max(8, 32 // jnp.dtype(dtype).itemsize)


def _vmem_capacity_bytes():
    # Per-generation VMEM: 128 MiB on v5e/v6e, 64 MiB/TC on v7x.
    try:
        return int(pltpu.get_tpu_info().vmem_capacity_bytes)
    except Exception:
        return 128 << 20


def _pick_row_tile(rows, dim, dtype, vmem_capacity):
    pack = _sublane_pack(dtype)
    itemsize = jnp.dtype(dtype).itemsize
    bytes_per_row = max(1, dim * itemsize)
    # Per-chip block target: capacity // 12 leaves room for 2x in + 2x out
    # double buffers plus the f32 intermediates of the upcast/reduce path.
    # (~5 MiB on v7x, ~10 MiB on v5e/v6e; >=4 MiB already hits ~85% of HBM BW.)
    target_block_bytes = max(1 << 20, vmem_capacity // 12)
    tile = max(pack, target_block_bytes // bytes_per_row)
    tile = max(pack, (tile // pack) * pack)               # multiple of packing
    # Keep the grid at >= ~4 steps so double-buffering overlaps and both v7x
    # TensorCores (grid sharded via dimension_semantics="parallel") get work.
    per_step = pl.cdiv(pl.cdiv(rows, 4), pack) * pack
    tile = min(tile, max(pack, per_step))
    # Never exceed the data (rounded up to the packing).
    rows_up = pl.cdiv(rows, pack) * pack
    return int(min(tile, rows_up))


def rmsnorm(x, g, eps=1e-8, *, row_tile=None):
    """RMSNorm over the last axis of x, matching the PyTorch reference."""
    dim = x.shape[-1]
    inv_scale = float(dim) ** 0.5                         # 1 / (dim ** -0.5)
    inv_eps = (1.0 / float(eps)) if eps > 0 else float("inf")

    orig_shape = x.shape
    x2 = x.reshape(-1, dim)                               # (R, D), no copy
    rows = x2.shape[0]
    g2 = g.reshape(1, dim).astype(jnp.float32)            # resident, pre-cast

    vmem_capacity = _vmem_capacity_bytes()
    if row_tile is None:
        row_tile = _pick_row_tile(rows, dim, x.dtype, vmem_capacity)

    grid = pl.cdiv(rows, row_tile)                        # ragged last block OK

    # Scoped-VMEM budget: double-buffered in + out blocks, f32 intermediates
    # for the upcast path, gamma, plus headroom — capped at chip capacity.
    io_block_bytes = row_tile * dim * jnp.dtype(x.dtype).itemsize
    f32_block_bytes = row_tile * dim * 4
    vmem_need = 4 * io_block_bytes + 2 * f32_block_bytes + dim * 4
    vmem_limit = int(min(vmem_capacity, max(vmem_need + (4 << 20), 16 << 20)))

    kernel = functools.partial(_rmsnorm_kernel, inv_scale=inv_scale, inv_eps=inv_eps)

    out = pl.pallas_call(
        kernel,
        out_shape=jax.ShapeDtypeStruct((rows, dim), x.dtype),
        grid_spec=pltpu.PrefetchScalarGridSpec(
            num_scalar_prefetch=0,
            grid=(grid,),
            in_specs=[
                # Full-extent last dim (== dim) is exempt from the 128 rule;
                # Mosaic masks the partial lane group if dim % 128 != 0.
                pl.BlockSpec((row_tile, dim), lambda i: (i, 0)),
                pl.BlockSpec((1, dim), lambda i: (0, 0)),   # gamma: no re-DMA
            ],
            out_specs=pl.BlockSpec((row_tile, dim), lambda i: (i, 0)),
        ),
        compiler_params=pltpu.CompilerParams(
            dimension_semantics=("parallel",),   # shards rows across TCs (v7x)
            vmem_limit_bytes=vmem_limit,
        ),
    )(x2, g2)

    return out.reshape(orig_shape)


def rmsnorm_ref(x, g, eps=1e-8):
    # Pure-JAX reference mirroring the PyTorch forward.
    dim = x.shape[-1]
    scale = dim ** (-0.5)
    norm = jnp.linalg.norm(x, axis=-1, keepdims=True) * scale
    return x / jnp.maximum(norm, eps) * g


if __name__ == "__main__":
    key = jax.random.PRNGKey(0)
    batch, seq, hidden = 2, 8, 32

    x = jax.random.normal(key, (batch, seq, hidden), dtype=jnp.float32)
    # Parameter g: nn.Parameter(torch.ones(dim)) -> deterministic ones.
    g = jnp.ones((hidden,), dtype=jnp.float32)

    out = rmsnorm(x, g)
    out = jax.block_until_ready(out)

    ref = rmsnorm_ref(x, g)
    assert out.shape == x.shape
    assert jnp.allclose(out, ref, atol=1e-5, rtol=1e-5), "mismatch vs reference"

    print("KERNEL_OK")
</pallas_src>

<mosaic_0001>
module attributes {stable_mosaic.version = 11 : i64} {
  func.func @_rmsnorm_kernel(%arg0: i32, %arg1: memref<8x32xf32, #tpu.memory_space<vmem>>, %arg2: memref<1x32xf32, #tpu.memory_space<vmem>>, %arg3: memref<8x32xf32, #tpu.memory_space<vmem>>) attributes {dimension_semantics = [#tpu.dimension_semantics<parallel>], iteration_bounds = array<i64: 2>, scalar_prefetch = 0 : i64, scratch_operands = 0 : i64, tpu.core_type = #tpu.core_type<tc>, window_params = [{transform_indices = @transform_0, window_bounds = array<i64: 8, 32>}, {pipeline_mode = #tpu.pipeline_mode<synchronous>, transform_indices = @transform_1, window_bounds = array<i64: 1, 32>}, {transform_indices = @transform_2, window_bounds = array<i64: 8, 32>}]} {
    %c0 = arith.constant 0 : index
    %c0_0 = arith.constant 0 : index
    %0 = vector.load %arg1[%c0, %c0_0] : memref<8x32xf32, #tpu.memory_space<vmem>>, vector<8x32xf32>
    %c0_1 = arith.constant 0 : index
    %c0_2 = arith.constant 0 : index
    %1 = vector.load %arg2[%c0_1, %c0_2] : memref<1x32xf32, #tpu.memory_space<vmem>>, vector<1x32xf32>
    %2 = arith.mulf %0, %0 : vector<8x32xf32>
    %cst = arith.constant dense<0.000000e+00> : vector<8xf32>
    %3 = vector.multi_reduction <add>, %2, %cst [1] : vector<8x32xf32> to vector<8xf32>
    %4 = vector.shape_cast %3 : vector<8xf32> to vector<8x1xf32>
    %5 = math.rsqrt %4 : vector<8x1xf32>
    %cst_3 = arith.constant 5.65685415 : f32
    %6 = vector.broadcast %cst_3 : f32 to vector<8x1xf32>
    %7 = arith.mulf %5, %6 : vector<8x1xf32>
    %cst_4 = arith.constant 1.000000e+08 : f32
    %8 = vector.broadcast %cst_4 : f32 to vector<8x1xf32>
    %9 = arith.minimumf %7, %8 : vector<8x1xf32>
    %10 = vector.broadcast %9 : vector<8x1xf32> to vector<8x32xf32>
    %11 = arith.mulf %0, %10 : vector<8x32xf32>
    %12 = vector.broadcast %1 : vector<1x32xf32> to vector<8x32xf32>
    %13 = arith.mulf %11, %12 : vector<8x32xf32>
    %c0_5 = arith.constant 0 : index
    %c0_6 = arith.constant 0 : index
    %14 = vector.load %arg3[%c0_5, %c0_6] : memref<8x32xf32, #tpu.memory_space<vmem>>, vector<8x32xf32>
    tpu.vector_store %arg3[%c0_5, %c0_6], %13 {strides = array<i32>} : memref<8x32xf32, #tpu.memory_space<vmem>>, vector<8x32xf32>,
    return
  }
  func.func @transform_0(%arg0: i32) -> (i32, i32) {
    %c0_i32 = arith.constant 0 : i32
    %c0_i32_0 = arith.constant 0 : i32
    return %arg0, %c0_i32 : i32, i32
  }
  func.func @transform_1(%arg0: i32) -> (i32, i32) {
    %c0_i32 = arith.constant 0 : i32
    %c0_i32_0 = arith.constant 0 : i32
    %c0_i32_1 = arith.constant 0 : i32
    return %c0_i32, %c0_i32_0 : i32, i32
  }
  func.func @transform_2(%arg0: i32) -> (i32, i32) {
    %c0_i32 = arith.constant 0 : i32
    %c0_i32_0 = arith.constant 0 : i32
    return %arg0, %c0_i32 : i32, i32
  }
}

</mosaic_0001>

<llo_original>
// kernel: tpu_custom_call.1
$region0: #{tpu_custom_call.1}
  #allocation0 [shape = 'u32[]', space=smem, size = 0x4, offset = 0x4, fixed_abs, tag = 'smem constant byte address 0x4 - core index']
  #allocation1 [shape = 'u32[144,128]{1,0:T(1,128)}', space=vmem, size = 0x12000, scoped, tag = 'internal scratch']
  %s0 = inlined_call_operand.hbm [shape: f32[16,32], index: 0, kind: input, shape index: {}]
  %s1 = inlined_call_operand.vmem [shape: f32[1,32], index: 1, kind: input, shape index: {}]
  %s2 = inlined_call_operand.hbm [shape: f32[16,32], index: 2, kind: output, shape index: {}]
  %s3 = sld [smem:[#allocation0]]
  $region45: #{tpu_custom_call.1} parent=0
    _
  %s5 = ssub.s32 1, %s3
  %s6 = scalar_select 0, %s5, %s3
  $region1: #{tpu_custom_call.1} parent=0
    #allocation2 [shape = 'u8[8192]{0}', space=vmem, size = 0x2000, scoped, tag = 'input window, operand 0']
    #allocation3 [shape = 's32[2]{0}', space=sflag, size = 0x8, scoped, tag = 'scoped memory for tpu_custom_call.1']
    #allocation4 [shape = 's32[2]{0}', space=sflag, size = 0x8, scoped, tag = 'scoped memory for tpu_custom_call.1']
    #allocation5 [shape = 'u8[8192]{0}', space=vmem, size = 0x2000, scoped, tag = 'output window, operand 0']
    %7 = vsyncpa [#allocation3], 0
    %s8 = scalar_lea.sflag [#allocation3], 1
    %9 = vsyncpa %s8, 0
    %10 = vsyncpa [#allocation4], 0
    %s11 = scalar_lea.sflag [#allocation4], 1
    %12 = vsyncpa %s11, 0
    loop: start=0, step=1, limit=4
    $region2: #{tpu_custom_call.1} parent=1 // loop_pre_header
      _
    $region3: #{tpu_custom_call.1} parent=1 // loop_header
      %s14 = sphi 0, %s18
      %p15 = scmp.ge.s32.totalorder %s14, 4
      %s24 = sphi 0, %s26
      %s27 = sphi 0, %s24
      %s28 = sphi 0, %s27
      %s44 = sphi 0, %s28
      %s48 = sphi 0, %s48
      %s50 = sphi 0, %s48
      %s51 = sphi 0, %s50
      %s65 = sphi 0, %s51
      %s71 = sphi 0, %s73
      %s74 = sphi 0, %s71
      %s75 = sphi 0, %s74
      %s91 = sphi 0, %s75
    $region4: #{tpu_custom_call.1} parent=1 // loop_header_branch
      %17 = sbr.rel (%p15) target = $region8
    $region5: #{tpu_custom_call.1} parent=1 // loop_body
      %s19 = ssub.s32 %s14, 1
      %s20 = ssub.s32 %s14, 2
      %s21 = sadd.s32 %s14, 1
      %s22 = ssub.s32 %s14, %s21
      %p23 = scmp.eq.s32.totalorder %s22, 0
      %s25 = sadd.s32 %s24, 1
      %s26 = scalar_select %p23, %s24, %s25
      %p29 = pneg %p23
      %p30 = scmp.eq.s32.totalorder %s14, 1
      %p31 = por %p29, %p30
      %p32 = scmp.ne.s32.totalorder %s24, %s27
      %p33 = scmp.eq.s32.totalorder %s14, 0
      %p34 = por %p32, %p33
      %p35 = scmp.ne.s32.totalorder %s24, %s27
      %p36 = scmp.eq.s32.totalorder %s19, 1
      %p37 = por %p35, %p36
      %p38 = scmp.ne.s32.totalorder %s27, %s28
      %p39 = scmp.eq.s32.totalorder %s19, 0
      %p40 = por %p38, %p39
      %p41 = scmp.ne.s32.totalorder %s27, %s28
      %p42 = scmp.eq.s32.totalorder %s20, 1
      %p43 = por %p41, %p42
      %p45 = scmp.ne.s32.totalorder %s28, %s44
      %p46 = scmp.eq.s32.totalorder %s20, 0
      %p47 = por %p45, %p46
      %s49 = sadd.s32 %s48, 1
      %p52 = scmp.eq.s32.totalorder %s14, 1
      %p53 = scmp.ne.s32.totalorder %s48, %s50
      %p54 = scmp.eq.s32.totalorder %s14, 0
      %p55 = por %p53, %p54
      %p56 = scmp.ne.s32.totalorder %s48, %s50
      %p57 = scmp.eq.s32.totalorder %s19, 1
      %p58 = por %p56, %p57
      %p59 = scmp.ne.s32.totalorder %s50, %s51
      %p60 = scmp.eq.s32.totalorder %s19, 0
      %p61 = por %p59, %p60
      %p62 = scmp.ne.s32.totalorder %s50, %s51
      %p63 = scmp.eq.s32.totalorder %s20, 1
      %p64 = por %p62, %p63
      %p66 = scmp.ne.s32.totalorder %s51, %s65
      %p67 = scmp.eq.s32.totalorder %s20, 0
      %p68 = por %p66, %p67
      %s69 = ssub.s32 %s14, %s21
      %p70 = scmp.eq.s32.totalorder %s69, 0
      %s72 = sadd.s32 %s71, 1
      %s73 = scalar_select %p70, %s71, %s72
      %p76 = pneg %p70
      %p77 = scmp.eq.s32.totalorder %s14, 1
      %p78 = por %p76, %p77
      %p79 = scmp.ne.s32.totalorder %s71, %s74
      %p80 = scmp.eq.s32.totalorder %s14, 0
      %p81 = por %p79, %p80
      %p82 = scmp.ne.s32.totalorder %s71, %s74
      %p83 = scmp.eq.s32.totalorder %s19, 1
      %p84 = por %p82, %p83
      %p85 = scmp.ne.s32.totalorder %s74, %s75
      %p86 = scmp.eq.s32.totalorder %s19, 0
      %p87 = por %p85, %p86
      %p88 = scmp.ne.s32.totalorder %s74, %s75
      %p89 = scmp.eq.s32.totalorder %s20, 1
      %p90 = por %p88, %p89
      %p92 = scmp.ne.s32.totalorder %s75, %s91
      %p93 = scmp.eq.s32.totalorder %s20, 0
      %p94 = por %p92, %p93
      %p95 = scmp.le.s32.totalorder 1, %s14
      %p96 = scmp.lt.s32.totalorder %s14, 3
      %p97 = pnand %p95, %p96
      %p98 = pneg %p97
      // Predicated region
      $region9: #{tpu_custom_call.1} parent=5 // pred_check
        _
      $region10: #{tpu_custom_call.1} parent=5 // pred_check_branch
        %100 = sbr.rel (%p97) target = $region12
      $region11: #{tpu_custom_call.1} parent=5 // pred_region
        %s101 = ssub.s32 %s14, 1
        // Predicated region
        $region13: #{tpu_custom_call.1} parent=11 // pred_check
          %p102 = pneg %p61
        $region14: #{tpu_custom_call.1} parent=11 // pred_check_branch
          %104 = sbr.rel (%p102) target = $region16
        $region15: #{tpu_custom_call.1} parent=11 // pred_region
          _
        $region16: #{tpu_custom_call.1} parent=11 // pred_fallthru
          _
      $region12: #{tpu_custom_call.1} parent=5 // pred_fallthru
        _
      %p105 = scmp.lt.s32.totalorder %s14, 2
      // Predicated region
      $region17: #{tpu_custom_call.1} parent=5 // pred_check
        %p106 = pneg %p105
      $region18: #{tpu_custom_call.1} parent=5 // pred_check_branch
        %108 = sbr.rel (%p106) target = $region20
      $region19: #{tpu_custom_call.1} parent=5 // pred_region
        // Predicated region
        $region21: #{tpu_custom_call.1} parent=19 // pred_check
          %p109 = pneg %p34
        $region22: #{tpu_custom_call.1} parent=19 // pred_check_branch
          %111 = sbr.rel (%p109) target = $region24
        $region23: #{tpu_custom_call.1} parent=19 // pred_region
          %s112 = sand.u32 %s24, 1
          %s113 = scalar_lea.sflag [#allocation3], %s112
          %s114 = sand.u32 %s24, 1
          %s115 = smul.addr %s114, 8
          %s116 = scalar_lea.vmem [#allocation2], %s115
          %s118 = ssub.s32 128, 128
          %119 = vsyncadd %s113, %s118
          %s120 = smul.addr %s14, 128
          %s121 = scalar_lea.hbm %s0, %s120
          %s123 = sshll.u32 %s116, 4
          %s124 = int_to_ptr.vmem [resolvable:$true] %s123
          %126 = dma.hbm_to_vmem [thread:$0]  %s121, 128, %s124, %s113
        $region24: #{tpu_custom_call.1} parent=19 // pred_fallthru
          _
      $region20: #{tpu_custom_call.1} parent=5 // pred_fallthru
        _
      %p127 = scmp.le.s32.totalorder 1, %s14
      %p128 = scmp.lt.s32.totalorder %s14, 3
      %p129 = pnand %p127, %p128
      %p130 = pneg %p129
      // Predicated region
      $region25: #{tpu_custom_call.1} parent=5 // pred_check
        _
      $region26: #{tpu_custom_call.1} parent=5 // pred_check_branch
        %132 = sbr.rel (%p129) target = $region28
      $region27: #{tpu_custom_call.1} parent=5 // pred_region
        %s133 = ssub.s32 %s14, 1
        %s134 = sand.u32 %s27, 1
        %s135 = scalar_lea.sflag [#allocation3], %s134
        %s136 = sand.u32 %s27, 1
        %s137 = smul.addr %s136, 8
        %s138 = scalar_lea.vmem [#allocation2], %s137
        // Predicated region
        $region29: #{tpu_custom_call.1} parent=27 // pred_check
          %p139 = pneg %p40
        $region30: #{tpu_custom_call.1} parent=27 // pred_check_branch
          %141 = sbr.rel (%p139) target = $region32
        $region31: #{tpu_custom_call.1} parent=27 // pred_region
          %142 = dma.done %s135, 128
        $region32: #{tpu_custom_call.1} parent=27 // pred_fallthru
          _
        %s143 = sand.u32 %s27, 1
        %s144 = scalar_lea.sflag [#allocation3], %s143
        %s145 = sand.u32 %s27, 1
        %s146 = smul.addr %s145, 8
        %s147 = scalar_lea.vmem [#allocation2], %s146
        %p148 = pneg %p40
        %p149 = pneg %p37
        %p150 = pneg %p61
        %p151 = pneg %p58
        %p152 = pneg %p87
        %p153 = pneg %p84
        %s154 = sand.u32 %s74, 1
        %s155 = scalar_lea.sflag [#allocation4], %s154
        %s156 = sand.u32 %s74, 1
        %s157 = smul.addr %s156, 8
        %s158 = scalar_lea.vmem [#allocation5], %s157
        %v159 = vld [vmem:[%s138] sm:$0xff]
        %v160 = vld [vmem:[%s1] sm:$0x1]
        %v161 = vmul.f32 %v159, %v159
        %vm162 = vcmask 261120
        %v163 = vsel %vm162, %v161, 0.0
        %164 = vadd.xlane.f32.xlu0 %v163
        %v165 = vpop.xlane.xlu0 %164
        %v166 = vrsqrt.pop %v165
        %v167 = vmul.f32 %v166, 5.656854
        %v168 = vmin.f32 %v167, 1e+08
        %v169 = vmul.f32 %v159, %v168
        %v171 = vlaneseq
        %v172 = vshrl.u32 %v171, 7
        %v173 = vsub.s32 0, %v172
        %v174 = vrot.slane %v160, %v173
        %v176 = vmul.f32 %v169, %v174
        %177 = vst.msk [vmem:[%s158] sm:$0xff] %vm162, %v176
        %s178 = sand.u32 %s74, 1
        %s179 = scalar_lea.sflag [#allocation4], %s178
        %s180 = sand.u32 %s74, 1
        %s181 = smul.addr %s180, 8
        %s182 = scalar_lea.vmem [#allocation5], %s181
        // Predicated region
        $region33: #{tpu_custom_call.1} parent=27 // pred_check
          %p183 = pneg %p84
        $region34: #{tpu_custom_call.1} parent=27 // pred_check_branch
          %185 = sbr.rel (%p183) target = $region36
        $region35: #{tpu_custom_call.1} parent=27 // pred_region
          %s187 = ssub.s32 128, 128
          %188 = vsyncadd %s179, %s187
          %s189 = smul.addr %s19, 128
          %s190 = scalar_lea.hbm %s2, %s189
          %s192 = sshll.u32 %s182, 4
          %s193 = int_to_ptr.vmem [resolvable:$true] %s192
          %195 = dma.vmem_to_hbm [thread:$0]  %s193, 128, %s190, %s179
        $region36: #{tpu_custom_call.1} parent=27 // pred_fallthru
          _
      $region28: #{tpu_custom_call.1} parent=5 // pred_fallthru
        _
      %p196 = scmp.le.s32.totalorder 2, %s14
      // Predicated region
      $region37: #{tpu_custom_call.1} parent=5 // pred_check
        %p197 = pneg %p196
      $region38: #{tpu_custom_call.1} parent=5 // pred_check_branch
        %199 = sbr.rel (%p197) target = $region40
      $region39: #{tpu_custom_call.1} parent=5 // pred_region
        %s200 = ssub.s32 %s14, 2
        // Predicated region
        $region41: #{tpu_custom_call.1} parent=39 // pred_check
          %p201 = pneg %p90
        $region42: #{tpu_custom_call.1} parent=39 // pred_check_branch
          %203 = sbr.rel (%p201) target = $region44
        $region43: #{tpu_custom_call.1} parent=39 // pred_region
          %s204 = sand.u32 %s75, 1
          %s205 = scalar_lea.sflag [#allocation4], %s204
          %s206 = sand.u32 %s75, 1
          %s207 = smul.addr %s206, 8
          %s208 = scalar_lea.vmem [#allocation5], %s207
          %209 = dma.done %s205, 128
        $region44: #{tpu_custom_call.1} parent=39 // pred_fallthru
          _
      $region40: #{tpu_custom_call.1} parent=5 // pred_fallthru
        _
    $region6: #{tpu_custom_call.1} parent=1 // loop_footer
      %s18 = sadd.s32 1, %s14
    $region7: #{tpu_custom_call.1} parent=1 // loop_footer_branch
      %13 = sbr.rel target = $region3
    $region8: #{tpu_custom_call.1} parent=1 // loop_exit
      _
    %210 = vsyncpa [#allocation3], 1
    %s211 = scalar_lea.sflag [#allocation3], 1
    %212 = vsyncpa %s211, 1
    %213 = vsyncpa [#allocation4], 1
    %s214 = scalar_lea.sflag [#allocation4], 1
    %215 = vsyncpa %s214, 1

</llo_original>
